<compile_context>
chip_gen: v5e
topology: v5e:2x2
jax: 0.10.0
libtpu: 0.0.40
codegen_flags: <defaults>
</compile_context>

<pallas_src>
import jax
import jax.numpy as jnp
from jax.experimental import pallas as pl
from jax.experimental.pallas import tpu as pltpu


LANE = 128
SUBLANE = 8


def _round_up(x, m):
    return ((x + m - 1) // m) * m


def _ensemble_mlp_kernel(x_ref, w1_ref, b1_ref, w2_ref, b2_ref, o_ref):
    x = x_ref[...]    # (k, Bp, DinP)
    w1 = w1_ref[...]  # (k, DinP, HP)   -- already transposed to (in, out)
    b1 = b1_ref[...]  # (k, 1, HP)
    w2 = w2_ref[...]  # (k, HP, DoutP)
    b2 = b2_ref[...]  # (k, 1, DoutP)

    # Batched matmuls over the ensemble axis; contraction on matching inner
    # dims (no transposes inside the kernel).
    h = jnp.einsum("kbi,kih->kbh", x, w1,
                   preferred_element_type=jnp.float32) + b1
    h = jnp.maximum(h, 0.0)  # ReLU
    out = jnp.einsum("kbh,kho->kbo", h, w2,
                     preferred_element_type=jnp.float32) + b2
    o_ref[...] = out.astype(o_ref.dtype)


def bootstrapp_ensemble_forward(xs, w1, b1, w2, b2):
    """xs: (k,B,Din) -> (k,B,Dout); member i applied to xs[i].

    w1: (k, H, Din), b1: (k, 1, H), w2: (k, Dout, H), b2: (k, 1, Dout)
    (PyTorch nn.Linear weight layout: (out_features, in_features)).
    """
    k, B, Din = xs.shape
    H = w1.shape[1]
    Dout = w2.shape[1]

    DinP = _round_up(Din, LANE)
    HP = _round_up(H, LANE)
    DoutP = _round_up(Dout, LANE)
    Bp = _round_up(B, SUBLANE)

    # One-time, outside-the-kernel layout prep (XLA side): transpose weights to
    # (in, out) and zero-pad feature dims to 128 lanes / batch to 8 sublanes.
    xs_p = jnp.pad(xs, ((0, 0), (0, Bp - B), (0, DinP - Din)))
    w1t = jnp.pad(jnp.swapaxes(w1, 1, 2), ((0, 0), (0, DinP - Din), (0, HP - H)))
    b1p = jnp.pad(b1, ((0, 0), (0, 0), (0, HP - H)))
    w2t = jnp.pad(jnp.swapaxes(w2, 1, 2), ((0, 0), (0, HP - H), (0, DoutP - Dout)))
    b2p = jnp.pad(b2, ((0, 0), (0, 0), (0, DoutP - Dout)))

    out_p = pl.pallas_call(
        _ensemble_mlp_kernel,
        out_shape=jax.ShapeDtypeStruct((k, Bp, DoutP), xs.dtype),
        grid_spec=pltpu.PrefetchScalarGridSpec(
            num_scalar_prefetch=0,
            grid=(1,),  # whole ensemble in a single kernel invocation
            in_specs=[
                pl.BlockSpec((k, Bp, DinP), lambda i: (0, 0, 0)),
                pl.BlockSpec((k, DinP, HP), lambda i: (0, 0, 0)),
                pl.BlockSpec((k, 1, HP), lambda i: (0, 0, 0)),
                pl.BlockSpec((k, HP, DoutP), lambda i: (0, 0, 0)),
                pl.BlockSpec((k, 1, DoutP), lambda i: (0, 0, 0)),
            ],
            out_specs=pl.BlockSpec((k, Bp, DoutP), lambda i: (0, 0, 0)),
        ),
        compiler_params=pltpu.CompilerParams(
            dimension_semantics=("arbitrary",)),
    )(xs_p, w1t, b1p, w2t, b2p)

    # Strip the lane/sublane padding.
    return out_p[:, :B, :Dout]


def xavier_normal(key, shape):
    # nn.init.xavier_normal_ for a (fan_out, fan_in) Linear weight, gain=1.
    fan_out, fan_in = shape[-2], shape[-1]
    std = (2.0 / (fan_in + fan_out)) ** 0.5
    return std * jax.random.normal(key, shape, dtype=jnp.float32)


if __name__ == "__main__":
    k, B, Din, H, Dout = 5, 8, 32, 32, 16

    key = jax.random.PRNGKey(0)
    kx, kw1, kw2 = jax.random.split(key, 3)

    # forward(xs): a list of k inputs, one per ensemble member -> stacked here.
    xs = jax.random.normal(kx, (k, B, Din), dtype=jnp.float32)

    # Per-member parameters (deepcopy of proto, then re-initialized):
    # weights Xavier-normal, biases zero.
    w1 = xavier_normal(kw1, (k, H, Din))
    b1 = jnp.zeros((k, 1, H), dtype=jnp.float32)
    w2 = xavier_normal(kw2, (k, Dout, H))
    b2 = jnp.zeros((k, 1, Dout), dtype=jnp.float32)

    out = bootstrapp_ensemble_forward(xs, w1, b1, w2, b2)
    out = jax.block_until_ready(out)

    # Pure-JAX reference (list comprehension over members, like the PyTorch forward).
    ref = jnp.stack([
        jnp.maximum(xs[i] @ w1[i].T + b1[i], 0.0) @ w2[i].T + b2[i]
        for i in range(k)
    ])
    assert out.shape == (k, B, Dout)
    assert jnp.allclose(out, ref, atol=1e-5, rtol=1e-5)

    print("KERNEL_OK")
</pallas_src>

<mosaic_0001>
module attributes {stable_mosaic.version = 11 : i64} {
  func.func @_ensemble_mlp_kernel(%arg0: i32, %arg1: memref<5x8x128xf32, #tpu.memory_space<vmem>>, %arg2: memref<5x128x128xf32, #tpu.memory_space<vmem>>, %arg3: memref<5x1x128xf32, #tpu.memory_space<vmem>>, %arg4: memref<5x128x128xf32, #tpu.memory_space<vmem>>, %arg5: memref<5x1x128xf32, #tpu.memory_space<vmem>>, %arg6: memref<5x8x128xf32, #tpu.memory_space<vmem>>) attributes {dimension_semantics = [#tpu.dimension_semantics<arbitrary>], iteration_bounds = array<i64: 1>, scalar_prefetch = 0 : i64, scratch_operands = 0 : i64, tpu.core_type = #tpu.core_type<tc>, window_params = [{pipeline_mode = #tpu.pipeline_mode<synchronous>, transform_indices = @transform_0, window_bounds = array<i64: 5, 8, 128>}, {pipeline_mode = #tpu.pipeline_mode<synchronous>, transform_indices = @transform_1, window_bounds = array<i64: 5, 128, 128>}, {pipeline_mode = #tpu.pipeline_mode<synchronous>, transform_indices = @transform_2, window_bounds = array<i64: 5, 1, 128>}, {pipeline_mode = #tpu.pipeline_mode<synchronous>, transform_indices = @transform_3, window_bounds = array<i64: 5, 128, 128>}, {pipeline_mode = #tpu.pipeline_mode<synchronous>, transform_indices = @transform_4, window_bounds = array<i64: 5, 1, 128>}, {pipeline_mode = #tpu.pipeline_mode<synchronous>, transform_indices = @transform_5, window_bounds = array<i64: 5, 8, 128>}]} {
    %c0 = arith.constant 0 : index
    %c0_0 = arith.constant 0 : index
    %c0_1 = arith.constant 0 : index
    %0 = vector.load %arg1[%c0, %c0_0, %c0_1] : memref<5x8x128xf32, #tpu.memory_space<vmem>>, vector<5x8x128xf32>
    %c0_2 = arith.constant 0 : index
    %c0_3 = arith.constant 0 : index
    %c0_4 = arith.constant 0 : index
    %1 = vector.load %arg2[%c0_2, %c0_3, %c0_4] : memref<5x128x128xf32, #tpu.memory_space<vmem>>, vector<5x128x128xf32>
    %c0_5 = arith.constant 0 : index
    %c0_6 = arith.constant 0 : index
    %c0_7 = arith.constant 0 : index
    %2 = vector.load %arg3[%c0_5, %c0_6, %c0_7] : memref<5x1x128xf32, #tpu.memory_space<vmem>>, vector<5x1x128xf32>
    %c0_8 = arith.constant 0 : index
    %c0_9 = arith.constant 0 : index
    %c0_10 = arith.constant 0 : index
    %3 = vector.load %arg4[%c0_8, %c0_9, %c0_10] : memref<5x128x128xf32, #tpu.memory_space<vmem>>, vector<5x128x128xf32>
    %c0_11 = arith.constant 0 : index
    %c0_12 = arith.constant 0 : index
    %c0_13 = arith.constant 0 : index
    %4 = vector.load %arg5[%c0_11, %c0_12, %c0_13] : memref<5x1x128xf32, #tpu.memory_space<vmem>>, vector<5x1x128xf32>
    "tpu.trace_start"() <{level = 10 : i32, message = "kbi,kih->kbh"}> : () -> ()
    %cst = arith.constant dense<0.000000e+00> : vector<5x8x128xf32>
    %5 = tpu.matmul %0, %1, %cst {dimension_numbers = #tpu.dot_dimension_numbers<[2], [1], [1], [2], [0, 0, 0, 1, 1, 2], [0], [0]>} : vector<5x8x128xf32>, vector<5x128x128xf32>, vector<5x8x128xf32> -> vector<5x8x128xf32>
    "tpu.trace_stop"() : () -> ()
    %6 = vector.broadcast %2 : vector<5x1x128xf32> to vector<5x8x128xf32>
    %7 = arith.addf %5, %6 : vector<5x8x128xf32>
    %cst_14 = arith.constant 0.000000e+00 : f32
    %8 = vector.broadcast %cst_14 : f32 to vector<5x8x128xf32>
    %9 = arith.maximumf %7, %8 : vector<5x8x128xf32>
    "tpu.trace_start"() <{level = 10 : i32, message = "kbh,kho->kbo"}> : () -> ()
    %cst_15 = arith.constant dense<0.000000e+00> : vector<5x8x128xf32>
    %10 = tpu.matmul %9, %3, %cst_15 {dimension_numbers = #tpu.dot_dimension_numbers<[2], [1], [1], [2], [0, 0, 0, 1, 1, 2], [0], [0]>} : vector<5x8x128xf32>, vector<5x128x128xf32>, vector<5x8x128xf32> -> vector<5x8x128xf32>
    "tpu.trace_stop"() : () -> ()
    %11 = vector.broadcast %4 : vector<5x1x128xf32> to vector<5x8x128xf32>
    %12 = arith.addf %10, %11 : vector<5x8x128xf32>
    %c0_16 = arith.constant 0 : index
    %c0_17 = arith.constant 0 : index
    %c0_18 = arith.constant 0 : index
    %13 = vector.load %arg6[%c0_16, %c0_17, %c0_18] : memref<5x8x128xf32, #tpu.memory_space<vmem>>, vector<5x8x128xf32>
    tpu.vector_store %arg6[%c0_16, %c0_17, %c0_18], %12 {strides = array<i32>} : memref<5x8x128xf32, #tpu.memory_space<vmem>>, vector<5x8x128xf32>,
    return
  }
  func.func @transform_0(%arg0: i32) -> (i32, i32, i32) {
    %c0_i32 = arith.constant 0 : i32
    %c0_i32_0 = arith.constant 0 : i32
    %c0_i32_1 = arith.constant 0 : i32
    %c0_i32_2 = arith.constant 0 : i32
    return %c0_i32, %c0_i32_0, %c0_i32_1 : i32, i32, i32
  }
  func.func @transform_1(%arg0: i32) -> (i32, i32, i32) {
    %c0_i32 = arith.constant 0 : i32
    %c0_i32_0 = arith.constant 0 : i32
    %c0_i32_1 = arith.constant 0 : i32
    %c0_i32_2 = arith.constant 0 : i32
    return %c0_i32, %c0_i32_0, %c0_i32_1 : i32, i32, i32
  }
  func.func @transform_2(%arg0: i32) -> (i32, i32, i32) {
    %c0_i32 = arith.constant 0 : i32
    %c0_i32_0 = arith.constant 0 : i32
    %c0_i32_1 = arith.constant 0 : i32
    %c0_i32_2 = arith.constant 0 : i32
    return %c0_i32, %c0_i32_0, %c0_i32_1 : i32, i32, i32
  }
  func.func @transform_3(%arg0: i32) -> (i32, i32, i32) {
    %c0_i32 = arith.constant 0 : i32
    %c0_i32_0 = arith.constant 0 : i32
    %c0_i32_1 = arith.constant 0 : i32
    %c0_i32_2 = arith.constant 0 : i32
    return %c0_i32, %c0_i32_0, %c0_i32_1 : i32, i32, i32
  }
  func.func @transform_4(%arg0: i32) -> (i32, i32, i32) {
    %c0_i32 = arith.constant 0 : i32
    %c0_i32_0 = arith.constant 0 : i32
    %c0_i32_1 = arith.constant 0 : i32
    %c0_i32_2 = arith.constant 0 : i32
    return %c0_i32, %c0_i32_0, %c0_i32_1 : i32, i32, i32
  }
  func.func @transform_5(%arg0: i32) -> (i32, i32, i32) {
    %c0_i32 = arith.constant 0 : i32
    %c0_i32_0 = arith.constant 0 : i32
    %c0_i32_1 = arith.constant 0 : i32
    %c0_i32_2 = arith.constant 0 : i32
    return %c0_i32, %c0_i32_0, %c0_i32_1 : i32, i32, i32
  }
}

</mosaic_0001>

<llo_original>
// kernel: tpu_custom_call.1
$region0: #{tpu_custom_call.1}
  #allocation0 [shape = 'u32[]', space=smem, size = 0x4, offset = 0x4, fixed_abs, tag = 'smem constant byte address 0x4 - core index']
  #allocation1 [shape = 'u32[72,128]{1,0:T(1,128)}', space=vmem, size = 0x9000, scoped, tag = 'internal scratch']
  %s0 = inlined_call_operand.hbm [shape: f32[5,8,128], index: 0, kind: input, shape index: {}]
  %s1 = inlined_call_operand.hbm [shape: f32[5,128,128], index: 1, kind: input, shape index: {}]
  %s2 = inlined_call_operand.hbm [shape: f32[5,1,128], index: 2, kind: input, shape index: {}]
  %s3 = inlined_call_operand.hbm [shape: f32[5,128,128], index: 3, kind: input, shape index: {}]
  %s4 = inlined_call_operand.hbm [shape: f32[5,1,128], index: 4, kind: input, shape index: {}]
  %s5 = inlined_call_operand.hbm [shape: f32[5,8,128], index: 5, kind: output, shape index: {}]
  %s6 = sld [smem:[#allocation0]]
  $region50: #{tpu_custom_call.1} parent=0
    _
  %s8 = ssub.s32 1, %s6
  %s9 = scalar_select 0, %s8, %s6
  $region1: #{tpu_custom_call.1} parent=0
    #allocation2 [shape = 'u8[20480]{0}', space=vmem, size = 0x5000, scoped, tag = 'input window, operand 0, single buffered']
    #allocation3 [shape = 's32[1]{0}', space=sflag, size = 0x4, scoped, tag = 'scoped memory for tpu_custom_call.1']
    #allocation4 [shape = 's32[1]{0}', space=sflag, size = 0x4, scoped, tag = 'scoped memory for tpu_custom_call.1']
    #allocation5 [shape = 'u8[327680]{0}', space=vmem, size = 0x50000, scoped, tag = 'input window, operand 1, single buffered']
    #allocation6 [shape = 's32[1]{0}', space=sflag, size = 0x4, scoped, tag = 'scoped memory for tpu_custom_call.1']
    #allocation7 [shape = 'u8[2560]{0}', space=vmem, size = 0xc00, scoped, tag = 'input window, operand 2, single buffered']
    #allocation8 [shape = 'u8[327680]{0}', space=vmem, size = 0x50000, scoped, tag = 'input window, operand 3, single buffered']
    #allocation9 [shape = 's32[1]{0}', space=sflag, size = 0x4, scoped, tag = 'scoped memory for tpu_custom_call.1']
    #allocation10 [shape = 'u8[2560]{0}', space=vmem, size = 0xc00, scoped, tag = 'input window, operand 4, single buffered']
    #allocation11 [shape = 'u8[20480]{0}', space=vmem, size = 0x5000, scoped, tag = 'output window, operand 0, single buffered']
    %10 = vsyncpa [#allocation3], 0
    %11 = vsyncpa [#allocation6], 0
    %12 = vsyncpa [#allocation9], 0
    %13 = vsyncpa [#allocation4], 0
    // Predicated region
    $region2: #{tpu_custom_call.1} parent=1 // pred_check
      _
    $region3: #{tpu_custom_call.1} parent=1 // pred_check_branch
      %15 = sbr.rel (0) target = $region5
    $region4: #{tpu_custom_call.1} parent=1 // pred_region
      %17 = vsyncadd [#allocation3], 0
      %s18 = sshll.u32 %s0, 4
      %s19 = int_to_ptr.hbm [resolvable:$true] %s18
      %s20 = sshll.u32 [#allocation2], 4
      %s21 = int_to_ptr.vmem [resolvable:$true] %s20
      %26 = dma.hbm_to_vmem [thread:$0]  %s19, 640, %s21, [#allocation3], 128, 128, 8
    $region5: #{tpu_custom_call.1} parent=1 // pred_fallthru
      _
    // Predicated region
    $region6: #{tpu_custom_call.1} parent=1 // pred_check
      _
    $region7: #{tpu_custom_call.1} parent=1 // pred_check_branch
      %28 = sbr.rel (0) target = $region9
    $region8: #{tpu_custom_call.1} parent=1 // pred_region
      %30 = vsyncadd [#allocation6], 0
      %s31 = sshll.u32 %s1, 4
      %s32 = int_to_ptr.hbm [resolvable:$true] %s31
      %s33 = sshll.u32 [#allocation5], 4
      %s34 = int_to_ptr.vmem [resolvable:$true] %s33
      %39 = dma.hbm_to_vmem [thread:$0]  %s32, 10240, %s34, [#allocation6], 128, 128, 8
    $region9: #{tpu_custom_call.1} parent=1 // pred_fallthru
      _
    // Predicated region
    $region10: #{tpu_custom_call.1} parent=1 // pred_check
      _
    $region11: #{tpu_custom_call.1} parent=1 // pred_check_branch
      %41 = sbr.rel (0) target = $region13
    $region12: #{tpu_custom_call.1} parent=1 // pred_region
      %43 = vsyncadd [#allocation6], 0
      %s44 = sshll.u32 %s2, 4
      %s45 = int_to_ptr.hbm [resolvable:$true] %s44
      %s46 = sshll.u32 [#allocation7], 4
      %s47 = int_to_ptr.vmem [resolvable:$true] %s46
      %52 = dma.hbm_to_vmem [thread:$0]  %s45, 80, %s47, [#allocation6], 16, 16, 1
    $region13: #{tpu_custom_call.1} parent=1 // pred_fallthru
      _
    // Predicated region
    $region14: #{tpu_custom_call.1} parent=1 // pred_check
      _
    $region15: #{tpu_custom_call.1} parent=1 // pred_check_branch
      %54 = sbr.rel (0) target = $region17
    $region16: #{tpu_custom_call.1} parent=1 // pred_region
      %56 = vsyncadd [#allocation9], 0
      %s57 = sshll.u32 %s3, 4
      %s58 = int_to_ptr.hbm [resolvable:$true] %s57
      %s59 = sshll.u32 [#allocation8], 4
      %s60 = int_to_ptr.vmem [resolvable:$true] %s59
      %65 = dma.hbm_to_vmem [thread:$0]  %s58, 10240, %s60, [#allocation9], 128, 128, 8
    $region17: #{tpu_custom_call.1} parent=1 // pred_fallthru
      _
    // Predicated region
    $region18: #{tpu_custom_call.1} parent=1 // pred_check
      _
    $region19: #{tpu_custom_call.1} parent=1 // pred_check_branch
      %67 = sbr.rel (0) target = $region21
    $region20: #{tpu_custom_call.1} parent=1 // pred_region
      %69 = vsyncadd [#allocation9], 0
      %s70 = sshll.u32 %s4, 4
      %s71 = int_to_ptr.hbm [resolvable:$true] %s70
      %s72 = sshll.u32 [#allocation10], 4
      %s73 = int_to_ptr.vmem [resolvable:$true] %s72
      %78 = dma.hbm_to_vmem [thread:$0]  %s71, 80, %s73, [#allocation9], 16, 16, 1
    $region21: #{tpu_custom_call.1} parent=1 // pred_fallthru
      _
    // Predicated region
    $region22: #{tpu_custom_call.1} parent=1 // pred_check
      _
    $region23: #{tpu_custom_call.1} parent=1 // pred_check_branch
      %80 = sbr.rel (0) target = $region25
    $region24: #{tpu_custom_call.1} parent=1 // pred_region
      %82 = dma.done [#allocation3], 640
    $region25: #{tpu_custom_call.1} parent=1 // pred_fallthru
      _
    // Predicated region
    $region26: #{tpu_custom_call.1} parent=1 // pred_check
      _
    $region27: #{tpu_custom_call.1} parent=1 // pred_check_branch
      %84 = sbr.rel (0) target = $region29
    $region28: #{tpu_custom_call.1} parent=1 // pred_region
      %86 = dma.done [#allocation6], 10240
    $region29: #{tpu_custom_call.1} parent=1 // pred_fallthru
      _
    // Predicated region
    $region30: #{tpu_custom_call.1} parent=1 // pred_check
      _
    $region31: #{tpu_custom_call.1} parent=1 // pred_check_branch
      %88 = sbr.rel (0) target = $region33
    $region32: #{tpu_custom_call.1} parent=1 // pred_region
      %90 = dma.done [#allocation6], 80
    $region33: #{tpu_custom_call.1} parent=1 // pred_fallthru
      _
    // Predicated region
    $region34: #{tpu_custom_call.1} parent=1 // pred_check
      _
    $region35: #{tpu_custom_call.1} parent=1 // pred_check_branch
      %92 = sbr.rel (0) target = $region37
    $region36: #{tpu_custom_call.1} parent=1 // pred_region
      %94 = dma.done [#allocation9], 10240
    $region37: #{tpu_custom_call.1} parent=1 // pred_fallthru
      _
    // Predicated region
    $region38: #{tpu_custom_call.1} parent=1 // pred_check
      _
    $region39: #{tpu_custom_call.1} parent=1 // pred_check_branch
      %96 = sbr.rel (0) target = $region41
    $region40: #{tpu_custom_call.1} parent=1 // pred_region
      %98 = dma.done [#allocation9], 80
    $region41: #{tpu_custom_call.1} parent=1 // pred_fallthru
      _
    %v99 = vld [vmem:[#allocation2] sm:$0xff]
    %v100 = vld [vmem:[#allocation2 + $0x8] sm:$0xff]
    %v101 = vld [vmem:[#allocation2 + $0x10] sm:$0xff]
    %v102 = vld [vmem:[#allocation2 + $0x18] sm:$0xff]
    %v103 = vld [vmem:[#allocation2 + $0x20] sm:$0xff]
    %v104 = vld [vmem:[#allocation5] sm:$0xff]
    %v105 = vld [vmem:[#allocation5 + $0x8] sm:$0xff]
    %v106 = vld [vmem:[#allocation5 + $0x10] sm:$0xff]
    %v107 = vld [vmem:[#allocation5 + $0x18] sm:$0xff]
    %v108 = vld [vmem:[#allocation5 + $0x20] sm:$0xff]
    %v109 = vld [vmem:[#allocation5 + $0x28] sm:$0xff]
    %v110 = vld [vmem:[#allocation5 + $0x30] sm:$0xff]
    %v111 = vld [vmem:[#allocation5 + $0x38] sm:$0xff]
    %v112 = vld [vmem:[#allocation5 + $0x40] sm:$0xff]
    %v113 = vld [vmem:[#allocation5 + $0x48] sm:$0xff]
    %v114 = vld [vmem:[#allocation5 + $0x50] sm:$0xff]
    %v115 = vld [vmem:[#allocation5 + $0x58] sm:$0xff]
    %v116 = vld [vmem:[#allocation5 + $0x60] sm:$0xff]
    %v117 = vld [vmem:[#allocation5 + $0x68] sm:$0xff]
    %v118 = vld [vmem:[#allocation5 + $0x70] sm:$0xff]
    %v119 = vld [vmem:[#allocation5 + $0x78] sm:$0xff]
    %v120 = vld [vmem:[#allocation5 + $0x80] sm:$0xff]
    %v121 = vld [vmem:[#allocation5 + $0x88] sm:$0xff]
    %v122 = vld [vmem:[#allocation5 + $0x90] sm:$0xff]
    %v123 = vld [vmem:[#allocation5 + $0x98] sm:$0xff]
    %v124 = vld [vmem:[#allocation5 + $0xa0] sm:$0xff]
    %v125 = vld [vmem:[#allocation5 + $0xa8] sm:$0xff]
    %v126 = vld [vmem:[#allocation5 + $0xb0] sm:$0xff]
    %v127 = vld [vmem:[#allocation5 + $0xb8] sm:$0xff]
    %v128 = vld [vmem:[#allocation5 + $0xc0] sm:$0xff]
    %v129 = vld [vmem:[#allocation5 + $0xc8] sm:$0xff]
    %v130 = vld [vmem:[#allocation5 + $0xd0] sm:$0xff]
    %v131 = vld [vmem:[#allocation5 + $0xd8] sm:$0xff]
    %v132 = vld [vmem:[#allocation5 + $0xe0] sm:$0xff]
    %v133 = vld [vmem:[#allocation5 + $0xe8] sm:$0xff]
    %v134 = vld [vmem:[#allocation5 + $0xf0] sm:$0xff]
    %v135 = vld [vmem:[#allocation5 + $0xf8] sm:$0xff]
    %v136 = vld [vmem:[#allocation5 + $0x100] sm:$0xff]
    %v137 = vld [vmem:[#allocation5 + $0x108] sm:$0xff]
    %v138 = vld [vmem:[#allocation5 + $0x110] sm:$0xff]
    %v139 = vld [vmem:[#allocation5 + $0x118] sm:$0xff]
    %v140 = vld [vmem:[#allocation5 + $0x120] sm:$0xff]
    %v141 = vld [vmem:[#allocation5 + $0x128] sm:$0xff]
    %v142 = vld [vmem:[#allocation5 + $0x130] sm:$0xff]
    %v143 = vld [vmem:[#allocation5 + $0x138] sm:$0xff]
    %v144 = vld [vmem:[#allocation5 + $0x140] sm:$0xff]
    %v145 = vld [vmem:[#allocation5 + $0x148] sm:$0xff]
    %v146 = vld [vmem:[#allocation5 + $0x150] sm:$0xff]
    %v147 = vld [vmem:[#allocation5 + $0x158] sm:$0xff]
    %v148 = vld [vmem:[#allocation5 + $0x160] sm:$0xff]
    %v149 = vld [vmem:[#allocation5 + $0x168] sm:$0xff]
    %v150 = vld [vmem:[#allocation5 + $0x170] sm:$0xff]
    %v151 = vld [vmem:[#allocation5 + $0x178] sm:$0xff]
    %v152 = vld [vmem:[#allocation5 + $0x180] sm:$0xff]
    %v153 = vld [vmem:[#allocation5 + $0x188] sm:$0xff]
    %v154 = vld [vmem:[#allocation5 + $0x190] sm:$0xff]
    %v155 = vld [vmem:[#allocation5 + $0x198] sm:$0xff]
    %v156 = vld [vmem:[#allocation5 + $0x1a0] sm:$0xff]
    %v157 = vld [vmem:[#allocation5 + $0x1a8] sm:$0xff]
    %v158 = vld [vmem:[#allocation5 + $0x1b0] sm:$0xff]
    %v159 = vld [vmem:[#allocation5 + $0x1b8] sm:$0xff]
    %v160 = vld [vmem:[#allocation5 + $0x1c0] sm:$0xff]
    %v161 = vld [vmem:[#allocation5 + $0x1c8] sm:$0xff]
    %v162 = vld [vmem:[#allocation5 + $0x1d0] sm:$0xff]
    %v163 = vld [vmem:[#allocation5 + $0x1d8] sm:$0xff]
    %v164 = vld [vmem:[#allocation5 + $0x1e0] sm:$0xff]
    %v165 = vld [vmem:[#allocation5 + $0x1e8] sm:$0xff]
    %v166 = vld [vmem:[#allocation5 + $0x1f0] sm:$0xff]
    %v167 = vld [vmem:[#allocation5 + $0x1f8] sm:$0xff]
    %v168 = vld [vmem:[#allocation5 + $0x200] sm:$0xff]
    %v169 = vld [vmem:[#allocation5 + $0x208] sm:$0xff]
    %v170 = vld [vmem:[#allocation5 + $0x210] sm:$0xff]
    %v171 = vld [vmem:[#allocation5 + $0x218] sm:$0xff]
    %v172 = vld [vmem:[#allocation5 + $0x220] sm:$0xff]
    %v173 = vld [vmem:[#allocation5 + $0x228] sm:$0xff]
    %v174 = vld [vmem:[#allocation5 + $0x230] sm:$0xff]
    %v175 = vld [vmem:[#allocation5 + $0x238] sm:$0xff]
    %v176 = vld [vmem:[#allocation5 + $0x240] sm:$0xff]
    %v177 = vld [vmem:[#allocation5 + $0x248] sm:$0xff]
    %v178 = vld [vmem:[#allocation5 + $0x250] sm:$0xff]
    %v179 = vld [vmem:[#allocation5 + $0x258] sm:$0xff]
    %v180 = vld [vmem:[#allocation5 + $0x260] sm:$0xff]
    %v181 = vld [vmem:[#allocation5 + $0x268] sm:$0xff]
    %v182 = vld [vmem:[#allocation5 + $0x270] sm:$0xff]
    %v183 = vld [vmem:[#allocation5 + $0x278] sm:$0xff]
    %v184 = vld [vmem:[#allocation7] sm:$0x1]
    %v185 = vld [vmem:[#allocation7 + $0x1] sm:$0x1]
    %v186 = vld [vmem:[#allocation7 + $0x2] sm:$0x1]
    %v187 = vld [vmem:[#allocation7 + $0x3] sm:$0x1]
    %v188 = vld [vmem:[#allocation7 + $0x4] sm:$0x1]
    %v189 = vld [vmem:[#allocation8] sm:$0xff]
    %v190 = vld [vmem:[#allocation8 + $0x8] sm:$0xff]
    %v191 = vld [vmem:[#allocation8 + $0x10] sm:$0xff]
    %v192 = vld [vmem:[#allocation8 + $0x18] sm:$0xff]
    %v193 = vld [vmem:[#allocation8 + $0x20] sm:$0xff]
    %v194 = vld [vmem:[#allocation8 + $0x28] sm:$0xff]
    %v195 = vld [vmem:[#allocation8 + $0x30] sm:$0xff]
    %v196 = vld [vmem:[#allocation8 + $0x38] sm:$0xff]
    %v197 = vld [vmem:[#allocation8 + $0x40] sm:$0xff]
    %v198 = vld [vmem:[#allocation8 + $0x48] sm:$0xff]
    %v199 = vld [vmem:[#allocation8 + $0x50] sm:$0xff]
    %v200 = vld [vmem:[#allocation8 + $0x58] sm:$0xff]
    %v201 = vld [vmem:[#allocation8 + $0x60] sm:$0xff]
    %v202 = vld [vmem:[#allocation8 + $0x68] sm:$0xff]
    %v203 = vld [vmem:[#allocation8 + $0x70] sm:$0xff]
    %v204 = vld [vmem:[#allocation8 + $0x78] sm:$0xff]
    %v205 = vld [vmem:[#allocation8 + $0x80] sm:$0xff]
    %v206 = vld [vmem:[#allocation8 + $0x88] sm:$0xff]
    %v207 = vld [vmem:[#allocation8 + $0x90] sm:$0xff]
    %v208 = vld [vmem:[#allocation8 + $0x98] sm:$0xff]
    %v209 = vld [vmem:[#allocation8 + $0xa0] sm:$0xff]
    %v210 = vld [vmem:[#allocation8 + $0xa8] sm:$0xff]
    %v211 = vld [vmem:[#allocation8 + $0xb0] sm:$0xff]
    %v212 = vld [vmem:[#allocation8 + $0xb8] sm:$0xff]
    %v213 = vld [vmem:[#allocation8 + $0xc0] sm:$0xff]
    %v214 = vld [vmem:[#allocation8 + $0xc8] sm:$0xff]
    %v215 = vld [vmem:[#allocation8 + $0xd0] sm:$0xff]
    %v216 = vld [vmem:[#allocation8 + $0xd8] sm:$0xff]
    %v217 = vld [vmem:[#allocation8 + $0xe0] sm:$0xff]
    %v218 = vld [vmem:[#allocation8 + $0xe8] sm:$0xff]
    %v219 = vld [vmem:[#allocation8 + $0xf0] sm:$0xff]
    %v220 = vld [vmem:[#allocation8 + $0xf8] sm:$0xff]
    %v221 = vld [vmem:[#allocation8 + $0x100] sm:$0xff]
    %v222 = vld [vmem:[#allocation8 + $0x108] sm:$0xff]
    %v223 = vld [vmem:[#allocation8 + $0x110] sm:$0xff]
    %v224 = vld [vmem:[#allocation8 + $0x118] sm:$0xff]
    %v225 = vld [vmem:[#allocation8 + $0x120] sm:$0xff]
    %v226 = vld [vmem:[#allocation8 + $0x128] sm:$0xff]
    %v227 = vld [vmem:[#allocation8 + $0x130] sm:$0xff]
    %v228 = vld [vmem:[#allocation8 + $0x138] sm:$0xff]
    %v229 = vld [vmem:[#allocation8 + $0x140] sm:$0xff]
    %v230 = vld [vmem:[#allocation8 + $0x148] sm:$0xff]
    %v231 = vld [vmem:[#allocation8 + $0x150] sm:$0xff]
    %v232 = vld [vmem:[#allocation8 + $0x158] sm:$0xff]
    %v233 = vld [vmem:[#allocation8 + $0x160] sm:$0xff]
    %v234 = vld [vmem:[#allocation8 + $0x168] sm:$0xff]
    %v235 = vld [vmem:[#allocation8 + $0x170] sm:$0xff]
    %v236 = vld [vmem:[#allocation8 + $0x178] sm:$0xff]
    %v237 = vld [vmem:[#allocation8 + $0x180] sm:$0xff]
    %v238 = vld [vmem:[#allocation8 + $0x188] sm:$0xff]
    %v239 = vld [vmem:[#allocation8 + $0x190] sm:$0xff]
    %v240 = vld [vmem:[#allocation8 + $0x198] sm:$0xff]
    %v241 = vld [vmem:[#allocation8 + $0x1a0] sm:$0xff]
    %v242 = vld [vmem:[#allocation8 + $0x1a8] sm:$0xff]
    %v243 = vld [vmem:[#allocation8 + $0x1b0] sm:$0xff]
    %v244 = vld [vmem:[#allocation8 + $0x1b8] sm:$0xff]
    %v245 = vld [vmem:[#allocation8 + $0x1c0] sm:$0xff]
    %v246 = vld [vmem:[#allocation8 + $0x1c8] sm:$0xff]
    %v247 = vld [vmem:[#allocation8 + $0x1d0] sm:$0xff]
    %v248 = vld [vmem:[#allocation8 + $0x1d8] sm:$0xff]
    %v249 = vld [vmem:[#allocation8 + $0x1e0] sm:$0xff]
    %v250 = vld [vmem:[#allocation8 + $0x1e8] sm:$0xff]
    %v251 = vld [vmem:[#allocation8 + $0x1f0] sm:$0xff]
    %v252 = vld [vmem:[#allocation8 + $0x1f8] sm:$0xff]
    %v253 = vld [vmem:[#allocation8 + $0x200] sm:$0xff]
    %v254 = vld [vmem:[#allocation8 + $0x208] sm:$0xff]
    %v255 = vld [vmem:[#allocation8 + $0x210] sm:$0xff]
    %v256 = vld [vmem:[#allocation8 + $0x218] sm:$0xff]
    %v257 = vld [vmem:[#allocation8 + $0x220] sm:$0xff]
    %v258 = vld [vmem:[#allocation8 + $0x228] sm:$0xff]
    %v259 = vld [vmem:[#allocation8 + $0x230] sm:$0xff]
    %v260 = vld [vmem:[#allocation8 + $0x238] sm:$0xff]
    %v261 = vld [vmem:[#allocation8 + $0x240] sm:$0xff]
    %v262 = vld [vmem:[#allocation8 + $0x248] sm:$0xff]
    %v263 = vld [vmem:[#allocation8 + $0x250] sm:$0xff]
    %v264 = vld [vmem:[#allocation8 + $0x258] sm:$0xff]
    %v265 = vld [vmem:[#allocation8 + $0x260] sm:$0xff]
    %v266 = vld [vmem:[#allocation8 + $0x268] sm:$0xff]
    %v267 = vld [vmem:[#allocation8 + $0x270] sm:$0xff]
    %v268 = vld [vmem:[#allocation8 + $0x278] sm:$0xff]
    %v269 = vld [vmem:[#allocation10] sm:$0x1]
    %v270 = vld [vmem:[#allocation10 + $0x1] sm:$0x1]
    %v271 = vld [vmem:[#allocation10 + $0x2] sm:$0x1]
    %v272 = vld [vmem:[#allocation10 + $0x3] sm:$0x1]
    %v273 = vld [vmem:[#allocation10 + $0x4] sm:$0x1]
    %v279 = vperm.slane %v184, 0
    %v280 = vperm.slane %v185, 0
    %v281 = vperm.slane %v186, 0
    %v282 = vperm.slane %v187, 0
    %v283 = vperm.slane %v188, 0
    %289 = vmatpush.msra.mxu0 %v119
    %290 = vmatpush.msra.mxu0 %v118
    %291 = vmatpush.msra.mxu0 %v117
    %292 = vmatpush.msra.mxu0 %v116
    %293 = vmatpush.msra.mxu0 %v115
    %294 = vmatpush.msra.mxu0 %v114
    %295 = vmatpush.msra.mxu0 %v113
    %296 = vmatpush.msra.mxu0 %v112
    %297 = vmatpush.msra.mxu0 %v111
    %298 = vmatpush.msra.mxu0 %v110
    %299 = vmatpush.msra.mxu0 %v109
    %300 = vmatpush.msra.mxu0 %v108
    %301 = vmatpush.msra.mxu0 %v107
    %302 = vmatpush.msra.mxu0 %v106
    %303 = vmatpush.msra.mxu0 %v105
    %304 = vmatpush.msra.mxu0 %v104
    %305 = vmatmul.f32.gmra.mxu0 %v99
    %v306 = vpop.f32.mrf.mxu0
    %v307 = vadd.f32 %v279, %v306
    %308 = vdwg.mxu0
    %309 = vmatpush.msra.mxu0 %v135
    %310 = vmatpush.msra.mxu0 %v134
    %311 = vmatpush.msra.mxu0 %v133
    %312 = vmatpush.msra.mxu0 %v132
    %313 = vmatpush.msra.mxu0 %v131
    %314 = vmatpush.msra.mxu0 %v130
    %315 = vmatpush.msra.mxu0 %v129
    %316 = vmatpush.msra.mxu0 %v128
    %317 = vmatpush.msra.mxu0 %v127
    %318 = vmatpush.msra.mxu0 %v126
    %319 = vmatpush.msra.mxu0 %v125
    %320 = vmatpush.msra.mxu0 %v124
    %321 = vmatpush.msra.mxu0 %v123
    %322 = vmatpush.msra.mxu0 %v122
    %323 = vmatpush.msra.mxu0 %v121
    %324 = vmatpush.msra.mxu0 %v120
    %325 = vmatmul.f32.gmra.mxu0 %v100
    %v326 = vpop.f32.mrf.mxu0
    %v327 = vadd.f32 %v280, %v326
    %328 = vdwg.mxu0
    %329 = vmatpush.msra.mxu0 %v151
    %330 = vmatpush.msra.mxu0 %v150
    %331 = vmatpush.msra.mxu0 %v149
    %332 = vmatpush.msra.mxu0 %v148
    %333 = vmatpush.msra.mxu0 %v147
    %334 = vmatpush.msra.mxu0 %v146
    %335 = vmatpush.msra.mxu0 %v145
    %336 = vmatpush.msra.mxu0 %v144
    %337 = vmatpush.msra.mxu0 %v143
    %338 = vmatpush.msra.mxu0 %v142
    %339 = vmatpush.msra.mxu0 %v141
    %340 = vmatpush.msra.mxu0 %v140
    %341 = vmatpush.msra.mxu0 %v139
    %342 = vmatpush.msra.mxu0 %v138
    %343 = vmatpush.msra.mxu0 %v137
    %344 = vmatpush.msra.mxu0 %v136
    %345 = vmatmul.f32.gmra.mxu0 %v101
    %v346 = vpop.f32.mrf.mxu0
    %v347 = vadd.f32 %v281, %v346
    %348 = vdwg.mxu0
    %349 = vmatpush.msra.mxu0 %v167
    %350 = vmatpush.msra.mxu0 %v166
    %351 = vmatpush.msra.mxu0 %v165
    %352 = vmatpush.msra.mxu0 %v164
    %353 = vmatpush.msra.mxu0 %v163
    %354 = vmatpush.msra.mxu0 %v162
    %355 = vmatpush.msra.mxu0 %v161
    %356 = vmatpush.msra.mxu0 %v160
    %357 = vmatpush.msra.mxu0 %v159
    %358 = vmatpush.msra.mxu0 %v158
    %359 = vmatpush.msra.mxu0 %v157
    %360 = vmatpush.msra.mxu0 %v156
    %361 = vmatpush.msra.mxu0 %v155
    %362 = vmatpush.msra.mxu0 %v154
    %363 = vmatpush.msra.mxu0 %v153
    %364 = vmatpush.msra.mxu0 %v152
    %365 = vmatmul.f32.gmra.mxu0 %v102
    %v366 = vpop.f32.mrf.mxu0
    %v367 = vadd.f32 %v282, %v366
    %368 = vdwg.mxu0
    %369 = vmatpush.msra.mxu0 %v183
    %370 = vmatpush.msra.mxu0 %v182
    %371 = vmatpush.msra.mxu0 %v181
    %372 = vmatpush.msra.mxu0 %v180
    %373 = vmatpush.msra.mxu0 %v179
    %374 = vmatpush.msra.mxu0 %v178
    %375 = vmatpush.msra.mxu0 %v177
    %376 = vmatpush.msra.mxu0 %v176
    %377 = vmatpush.msra.mxu0 %v175
    %378 = vmatpush.msra.mxu0 %v174
    %379 = vmatpush.msra.mxu0 %v173
    %380 = vmatpush.msra.mxu0 %v172
    %381 = vmatpush.msra.mxu0 %v171
    %382 = vmatpush.msra.mxu0 %v170
    %383 = vmatpush.msra.mxu0 %v169
    %384 = vmatpush.msra.mxu0 %v168
    %385 = vmatmul.f32.gmra.mxu0 %v103
    %v386 = vpop.f32.mrf.mxu0
    %v387 = vadd.f32 %v283, %v386
    %388 = vdwg.mxu0
    %v389 = vmax.f32 %v307, 0.0
    %v390 = vmax.f32 %v327, 0.0
    %v391 = vmax.f32 %v347, 0.0
    %v392 = vmax.f32 %v367, 0.0
    %v393 = vmax.f32 %v387, 0.0
    %v399 = vperm.slane %v269, 0
    %v400 = vperm.slane %v270, 0
    %v401 = vperm.slane %v271, 0
    %v402 = vperm.slane %v272, 0
    %v403 = vperm.slane %v273, 0
    %409 = vmatpush.msra.mxu0 %v204
    %410 = vmatpush.msra.mxu0 %v203
    %411 = vmatpush.msra.mxu0 %v202
    %412 = vmatpush.msra.mxu0 %v201
    %413 = vmatpush.msra.mxu0 %v200
    %414 = vmatpush.msra.mxu0 %v199
    %415 = vmatpush.msra.mxu0 %v198
    %416 = vmatpush.msra.mxu0 %v197
    %417 = vmatpush.msra.mxu0 %v196
    %418 = vmatpush.msra.mxu0 %v195
    %419 = vmatpush.msra.mxu0 %v194
    %420 = vmatpush.msra.mxu0 %v193
    %421 = vmatpush.msra.mxu0 %v192
    %422 = vmatpush.msra.mxu0 %v191
    %423 = vmatpush.msra.mxu0 %v190
    %424 = vmatpush.msra.mxu0 %v189
    %425 = vmatmul.f32.gmra.mxu0 %v389
    %v426 = vpop.f32.mrf.mxu0
    %v427 = vadd.f32 %v399, %v426
    %428 = vdwg.mxu0
    %429 = vmatpush.msra.mxu0 %v220
    %430 = vmatpush.msra.mxu0 %v219
    %431 = vmatpush.msra.mxu0 %v218
    %432 = vmatpush.msra.mxu0 %v217
    %433 = vmatpush.msra.mxu0 %v216
    %434 = vmatpush.msra.mxu0 %v215
    %435 = vmatpush.msra.mxu0 %v214
    %436 = vmatpush.msra.mxu0 %v213
    %437 = vmatpush.msra.mxu0 %v212
    %438 = vmatpush.msra.mxu0 %v211
    %439 = vmatpush.msra.mxu0 %v210
    %440 = vmatpush.msra.mxu0 %v209
    %441 = vmatpush.msra.mxu0 %v208
    %442 = vmatpush.msra.mxu0 %v207
    %443 = vmatpush.msra.mxu0 %v206
    %444 = vmatpush.msra.mxu0 %v205
    %445 = vmatmul.f32.gmra.mxu0 %v390
    %v446 = vpop.f32.mrf.mxu0
    %v447 = vadd.f32 %v400, %v446
    %448 = vdwg.mxu0
    %449 = vmatpush.msra.mxu0 %v236
    %450 = vmatpush.msra.mxu0 %v235
    %451 = vmatpush.msra.mxu0 %v234
    %452 = vmatpush.msra.mxu0 %v233
    %453 = vmatpush.msra.mxu0 %v232
    %454 = vmatpush.msra.mxu0 %v231
    %455 = vmatpush.msra.mxu0 %v230
    %456 = vmatpush.msra.mxu0 %v229
    %457 = vmatpush.msra.mxu0 %v228
    %458 = vmatpush.msra.mxu0 %v227
    %459 = vmatpush.msra.mxu0 %v226
    %460 = vmatpush.msra.mxu0 %v225
    %461 = vmatpush.msra.mxu0 %v224
    %462 = vmatpush.msra.mxu0 %v223
    %463 = vmatpush.msra.mxu0 %v222
    %464 = vmatpush.msra.mxu0 %v221
    %465 = vmatmul.f32.gmra.mxu0 %v391
    %v466 = vpop.f32.mrf.mxu0
    %v467 = vadd.f32 %v401, %v466
    %468 = vdwg.mxu0
    %469 = vmatpush.msra.mxu0 %v252
    %470 = vmatpush.msra.mxu0 %v251
    %471 = vmatpush.msra.mxu0 %v250
    %472 = vmatpush.msra.mxu0 %v249
    %473 = vmatpush.msra.mxu0 %v248
    %474 = vmatpush.msra.mxu0 %v247
    %475 = vmatpush.msra.mxu0 %v246
    %476 = vmatpush.msra.mxu0 %v245
    %477 = vmatpush.msra.mxu0 %v244
    %478 = vmatpush.msra.mxu0 %v243
    %479 = vmatpush.msra.mxu0 %v242
    %480 = vmatpush.msra.mxu0 %v241
    %481 = vmatpush.msra.mxu0 %v240
    %482 = vmatpush.msra.mxu0 %v239
    %483 = vmatpush.msra.mxu0 %v238
    %484 = vmatpush.msra.mxu0 %v237
    %485 = vmatmul.f32.gmra.mxu0 %v392
    %v486 = vpop.f32.mrf.mxu0
    %v487 = vadd.f32 %v402, %v486
    %488 = vdwg.mxu0
    %489 = vmatpush.msra.mxu0 %v268
    %490 = vmatpush.msra.mxu0 %v267
    %491 = vmatpush.msra.mxu0 %v266
    %492 = vmatpush.msra.mxu0 %v265
    %493 = vmatpush.msra.mxu0 %v264
    %494 = vmatpush.msra.mxu0 %v263
    %495 = vmatpush.msra.mxu0 %v262
    %496 = vmatpush.msra.mxu0 %v261
    %497 = vmatpush.msra.mxu0 %v260
    %498 = vmatpush.msra.mxu0 %v259
    %499 = vmatpush.msra.mxu0 %v258
    %500 = vmatpush.msra.mxu0 %v257
    %501 = vmatpush.msra.mxu0 %v256
    %502 = vmatpush.msra.mxu0 %v255
    %503 = vmatpush.msra.mxu0 %v254
    %504 = vmatpush.msra.mxu0 %v253
    %505 = vmatmul.f32.gmra.mxu0 %v393
    %v506 = vpop.f32.mrf.mxu0
    %v507 = vadd.f32 %v403, %v506
    %508 = vdwg.mxu0
    %509 = vst [vmem:[#allocation11] sm:$0xff] %v427
    %510 = vst [vmem:[#allocation11 + $0x8] sm:$0xff] %v447
    %511 = vst [vmem:[#allocation11 + $0x10] sm:$0xff] %v467
    %512 = vst [vmem:[#allocation11 + $0x18] sm:$0xff] %v487
    %513 = vst [vmem:[#allocation11 + $0x20] sm:$0xff] %v507
    // Predicated region
    $region42: #{tpu_custom_call.1} parent=1 // pred_check
      _
    $region43: #{tpu_custom_call.1} parent=1 // pred_check_branch
      %515 = sbr.rel (0) target = $region45
    $region44: #{tpu_custom_call.1} parent=1 // pred_region
      %517 = vsyncadd [#allocation4], 0
      %s518 = sshll.u32 [#allocation11], 4
      %s519 = int_to_ptr.vmem [resolvable:$true] %s518
      %s520 = sshll.u32 %s5, 4
      %s521 = int_to_ptr.hbm [resolvable:$true] %s520
      %526 = dma.vmem_to_hbm [thread:$0]  %s519, 640, %s521, [#allocation4], 128, 128, 8
    $region45: #{tpu_custom_call.1} parent=1 // pred_fallthru
      _
    // Predicated region
    $region46: #{tpu_custom_call.1} parent=1 // pred_check
      _
    $region47: #{tpu_custom_call.1} parent=1 // pred_check_branch
      %528 = sbr.rel (0) target = $region49
    $region48: #{tpu_custom_call.1} parent=1 // pred_region
      %530 = dma.done [#allocation4], 640
    $region49: #{tpu_custom_call.1} parent=1 // pred_fallthru
      _
    %531 = vsyncpa [#allocation3], 1
    %532 = vsyncpa [#allocation6], 1
    %533 = vsyncpa [#allocation9], 1
    %534 = vsyncpa [#allocation4], 1

</llo_original>
